<compile_context>
chip_gen: v6e
topology: v6e:2x2x1
jax: 0.10.0
libtpu: 0.0.40
codegen_flags: <defaults>
</compile_context>

<pallas_src>
import jax
import jax.numpy as jnp
from jax.experimental import pallas as pl
from jax.experimental.pallas import tpu as pltpu


def aldnet1_kernel(x_ref, t_ref, w1_ref, w2_ref, b12_ref, w3_ref, b3_ref, o_ref):
    # linear_1(x): (TB, N) @ (N, M) on the MXU with f32 accumulation.
    h = jnp.dot(x_ref[...], w1_ref[...], preferred_element_type=jnp.float32)
    # linear_2(t): rank-1 outer product -> VPU broadcast multiply; fused bias.
    h = h + t_ref[...] * w2_ref[...] + b12_ref[...]
    h = jnp.maximum(h, 0.0)
    # linear_3: (M -> 1) projection as VPU multiply + lane reduction (XLU),
    # avoiding a width-1 MXU matmul and its result-FIFO drain.
    o_ref[...] = jnp.sum(h * w3_ref[...], axis=-1, keepdims=True) + b3_ref[...]


def aldnet1_forward(x, t, params, *, block_b=512):
    """x: (B, N) f32, t: (B, 1) f32 -> (B, 1) f32."""
    w1, b1, w2, b2, w3, b3 = params
    B, N = x.shape
    M = w1.shape[1]

    # Fold the two biases (both added to the same (B, M) tensor) and present
    # w3 as a (1, M) lane row for the in-kernel VPU/XLU projection.
    b12 = (b1 + b2).reshape(1, M)
    w3_row = w3.reshape(1, M)
    b3 = b3.reshape(1, 1)

    # Batch tile: multiple of 8 (sublane quantum), capped at block_b (>=512
    # amortizes the ~0.35 us/step overhead).  Per-step VMEM at TB=512 is
    # ~2*TB*(N+1)*4 (double-buffered inputs) + TB*M*4 (h) + weights, well
    # under the 32 MiB scoped default even on v7x's 64 MiB VMEM.
    tb = min(block_b, ((B + 7) // 8) * 8)
    b_pad = pl.cdiv(B, tb) * tb
    if b_pad != B:
        x = jnp.pad(x, ((0, b_pad - B), (0, 0)))
        t = jnp.pad(t, ((0, b_pad - B), (0, 0)))

    # TODO(synk): for bandwidth-bound deployments, cast x/w1 to bf16 (keeping
    # preferred_element_type=f32 and f32 elementwise math) to halve the
    # dominant HBM stream; kept f32 here for bit-level parity with the ref.
    out = pl.pallas_call(
        aldnet1_kernel,
        out_shape=jax.ShapeDtypeStruct((b_pad, 1), jnp.float32),
        grid=(b_pad // tb,),
        in_specs=[
            pl.BlockSpec((tb, N), lambda i: (i, 0)),   # x: streamed per tile
            pl.BlockSpec((tb, 1), lambda i: (i, 0)),   # t: streamed per tile
            pl.BlockSpec((N, M), lambda i: (0, 0)),    # w1: VMEM-resident
            pl.BlockSpec((1, M), lambda i: (0, 0)),    # w2
            pl.BlockSpec((1, M), lambda i: (0, 0)),    # b1 + b2 (folded)
            pl.BlockSpec((1, M), lambda i: (0, 0)),    # w3 as a lane row
            pl.BlockSpec((1, 1), lambda i: (0, 0)),    # b3
        ],
        out_specs=pl.BlockSpec((tb, 1), lambda i: (i, 0)),
        compiler_params=pltpu.CompilerParams(
            dimension_semantics=("parallel",),  # megacore split on v7x; no-op on v5e/v6e
        ),
    )(x, t, w1, w2, b12, w3_row, b3)
    return out[:B]


def init_params(key, N, M):
    """Deterministic init mimicking nn.Linear's U(-1/sqrt(fan_in), 1/sqrt(fan_in))."""
    ks = jax.random.split(key, 6)

    def unif(k, shape, fan_in):
        bound = 1.0 / jnp.sqrt(jnp.float32(fan_in))
        return jax.random.uniform(k, shape, jnp.float32, -bound, bound)

    # Stored transposed relative to torch's (out, in) layout: (in, out).
    w1 = unif(ks[0], (N, M), N)
    b1 = unif(ks[1], (1, M), N)
    w2 = unif(ks[2], (1, M), 1)
    b2 = unif(ks[3], (1, M), 1)
    w3 = unif(ks[4], (M, 1), M)
    b3 = unif(ks[5], (1, 1), M)
    return (w1, b1, w2, b2, w3, b3)


def aldnet1_reference(x, t, params):
    w1, b1, w2, b2, w3, b3 = params
    h = x @ w1 + b1 + t @ w2 + b2
    h = jnp.maximum(h, 0.0)
    return h @ w3 + b3


if __name__ == "__main__":
    N, M, B = 32, 64, 8
    key = jax.random.PRNGKey(0)
    kx, kt, kp = jax.random.split(key, 3)

    x = jax.random.normal(kx, (B, N), jnp.float32)
    t = jax.random.normal(kt, (B, 1), jnp.float32)
    params = init_params(kp, N, M)

    out = jax.block_until_ready(aldnet1_forward(x, t, params))
    ref = aldnet1_reference(x, t, params)
    assert out.shape == (B, 1)
    assert float(jnp.max(jnp.abs(out - ref))) < 1e-4

    # Exercise the multi-tile + padded path (B not a multiple of the tile,
    # grid of 3 steps) with a small block so the test stays cheap.
    B2 = 300
    x2 = jax.random.normal(kx, (B2, N), jnp.float32)
    t2 = jax.random.normal(kt, (B2, 1), jnp.float32)
    out2 = jax.block_until_ready(aldnet1_forward(x2, t2, params, block_b=128))
    ref2 = aldnet1_reference(x2, t2, params)
    assert out2.shape == (B2, 1)
    assert float(jnp.max(jnp.abs(out2 - ref2))) < 1e-4

    print("KERNEL_OK")
</pallas_src>

<mosaic_0001>
module attributes {stable_mosaic.version = 11 : i64} {
  func.func @aldnet1_kernel(%arg0: i32, %arg1: memref<8x32xf32, #tpu.memory_space<vmem>>, %arg2: memref<8x1xf32, #tpu.memory_space<vmem>>, %arg3: memref<32x64xf32, #tpu.memory_space<vmem>>, %arg4: memref<1x64xf32, #tpu.memory_space<vmem>>, %arg5: memref<1x64xf32, #tpu.memory_space<vmem>>, %arg6: memref<1x64xf32, #tpu.memory_space<vmem>>, %arg7: memref<1x1xf32, #tpu.memory_space<vmem>>, %arg8: memref<8x1xf32, #tpu.memory_space<vmem>>) attributes {dimension_semantics = [#tpu.dimension_semantics<parallel>], iteration_bounds = array<i64: 1>, scalar_prefetch = 0 : i64, scratch_operands = 0 : i64, tpu.core_type = #tpu.core_type<tc>, window_params = [{transform_indices = @transform_0, window_bounds = array<i64: 8, 32>}, {transform_indices = @transform_1, window_bounds = array<i64: 8, 1>}, {pipeline_mode = #tpu.pipeline_mode<synchronous>, transform_indices = @transform_2, window_bounds = array<i64: 32, 64>}, {pipeline_mode = #tpu.pipeline_mode<synchronous>, transform_indices = @transform_3, window_bounds = array<i64: 1, 64>}, {pipeline_mode = #tpu.pipeline_mode<synchronous>, transform_indices = @transform_4, window_bounds = array<i64: 1, 64>}, {pipeline_mode = #tpu.pipeline_mode<synchronous>, transform_indices = @transform_5, window_bounds = array<i64: 1, 64>}, {pipeline_mode = #tpu.pipeline_mode<synchronous>, transform_indices = @transform_6, window_bounds = array<i64: 1, 1>}, {transform_indices = @transform_7, window_bounds = array<i64: 8, 1>}]} {
    %c0 = arith.constant 0 : index
    %c0_0 = arith.constant 0 : index
    %0 = vector.load %arg1[%c0, %c0_0] : memref<8x32xf32, #tpu.memory_space<vmem>>, vector<8x32xf32>
    %c0_1 = arith.constant 0 : index
    %c0_2 = arith.constant 0 : index
    %1 = vector.load %arg3[%c0_1, %c0_2] : memref<32x64xf32, #tpu.memory_space<vmem>>, vector<32x64xf32>
    %cst = arith.constant dense<0.000000e+00> : vector<8x64xf32>
    %2 = tpu.matmul %0, %1, %cst {dimension_numbers = #tpu.dot_dimension_numbers<[1], [0], [0], [1], [0, 0, 1, 1], [], []>} : vector<8x32xf32>, vector<32x64xf32>, vector<8x64xf32> -> vector<8x64xf32>
    %c0_3 = arith.constant 0 : index
    %c0_4 = arith.constant 0 : index
    %3 = vector.load %arg2[%c0_3, %c0_4] : memref<8x1xf32, #tpu.memory_space<vmem>>, vector<8x1xf32>
    %c0_5 = arith.constant 0 : index
    %c0_6 = arith.constant 0 : index
    %4 = vector.load %arg4[%c0_5, %c0_6] : memref<1x64xf32, #tpu.memory_space<vmem>>, vector<1x64xf32>
    %5 = vector.broadcast %3 : vector<8x1xf32> to vector<8x64xf32>
    %6 = vector.broadcast %4 : vector<1x64xf32> to vector<8x64xf32>
    %7 = arith.mulf %5, %6 : vector<8x64xf32>
    %8 = arith.addf %2, %7 : vector<8x64xf32>
    %c0_7 = arith.constant 0 : index
    %c0_8 = arith.constant 0 : index
    %9 = vector.load %arg5[%c0_7, %c0_8] : memref<1x64xf32, #tpu.memory_space<vmem>>, vector<1x64xf32>
    %10 = vector.broadcast %9 : vector<1x64xf32> to vector<8x64xf32>
    %11 = arith.addf %8, %10 : vector<8x64xf32>
    %cst_9 = arith.constant 0.000000e+00 : f32
    %12 = vector.broadcast %cst_9 : f32 to vector<8x64xf32>
    %13 = arith.maximumf %11, %12 : vector<8x64xf32>
    %c0_10 = arith.constant 0 : index
    %c0_11 = arith.constant 0 : index
    %14 = vector.load %arg6[%c0_10, %c0_11] : memref<1x64xf32, #tpu.memory_space<vmem>>, vector<1x64xf32>
    %15 = vector.broadcast %14 : vector<1x64xf32> to vector<8x64xf32>
    %16 = arith.mulf %13, %15 : vector<8x64xf32>
    %cst_12 = arith.constant dense<0.000000e+00> : vector<8xf32>
    %17 = vector.multi_reduction <add>, %16, %cst_12 [1] : vector<8x64xf32> to vector<8xf32>
    %18 = vector.shape_cast %17 : vector<8xf32> to vector<8x1xf32>
    %c0_13 = arith.constant 0 : index
    %c0_14 = arith.constant 0 : index
    %19 = vector.load %arg7[%c0_13, %c0_14] : memref<1x1xf32, #tpu.memory_space<vmem>>, vector<1x1xf32>
    %20 = vector.broadcast %19 : vector<1x1xf32> to vector<8x1xf32>
    %21 = arith.addf %18, %20 : vector<8x1xf32>
    %c0_15 = arith.constant 0 : index
    %c0_16 = arith.constant 0 : index
    %22 = vector.load %arg8[%c0_15, %c0_16] : memref<8x1xf32, #tpu.memory_space<vmem>>, vector<8x1xf32>
    tpu.vector_store %arg8[%c0_15, %c0_16], %21 {strides = array<i32>} : memref<8x1xf32, #tpu.memory_space<vmem>>, vector<8x1xf32>,
    return
  }
  func.func @transform_0(%arg0: i32) -> (i32, i32) {
    %c0_i32 = arith.constant 0 : i32
    %c0_i32_0 = arith.constant 0 : i32
    return %arg0, %c0_i32 : i32, i32
  }
  func.func @transform_1(%arg0: i32) -> (i32, i32) {
    %c0_i32 = arith.constant 0 : i32
    %c0_i32_0 = arith.constant 0 : i32
    return %arg0, %c0_i32 : i32, i32
  }
  func.func @transform_2(%arg0: i32) -> (i32, i32) {
    %c0_i32 = arith.constant 0 : i32
    %c0_i32_0 = arith.constant 0 : i32
    %c0_i32_1 = arith.constant 0 : i32
    return %c0_i32, %c0_i32_0 : i32, i32
  }
  func.func @transform_3(%arg0: i32) -> (i32, i32) {
    %c0_i32 = arith.constant 0 : i32
    %c0_i32_0 = arith.constant 0 : i32
    %c0_i32_1 = arith.constant 0 : i32
    return %c0_i32, %c0_i32_0 : i32, i32
  }
  func.func @transform_4(%arg0: i32) -> (i32, i32) {
    %c0_i32 = arith.constant 0 : i32
    %c0_i32_0 = arith.constant 0 : i32
    %c0_i32_1 = arith.constant 0 : i32
    return %c0_i32, %c0_i32_0 : i32, i32
  }
  func.func @transform_5(%arg0: i32) -> (i32, i32) {
    %c0_i32 = arith.constant 0 : i32
    %c0_i32_0 = arith.constant 0 : i32
    %c0_i32_1 = arith.constant 0 : i32
    return %c0_i32, %c0_i32_0 : i32, i32
  }
  func.func @transform_6(%arg0: i32) -> (i32, i32) {
    %c0_i32 = arith.constant 0 : i32
    %c0_i32_0 = arith.constant 0 : i32
    %c0_i32_1 = arith.constant 0 : i32
    return %c0_i32, %c0_i32_0 : i32, i32
  }
  func.func @transform_7(%arg0: i32) -> (i32, i32) {
    %c0_i32 = arith.constant 0 : i32
    %c0_i32_0 = arith.constant 0 : i32
    return %arg0, %c0_i32 : i32, i32
  }
}

</mosaic_0001>

<llo_original>
// kernel: tpu_custom_call.1
$region0: #{tpu_custom_call.1}
  #allocation0 [shape = 'u32[]', space=smem, size = 0x4, offset = 0x4, fixed_abs, tag = 'smem constant byte address 0x4 - core index']
  #allocation1 [shape = 'u32[144,128]{1,0:T(1,128)}', space=vmem, size = 0x12000, scoped, tag = 'internal scratch']
  #allocation2 [shape = 'f32[1,1]{1,0:T(1,128)S(1)}', space=vmem, size = 0x200, scoped, tag = 'scoped memory for tpu_custom_call.1']
  %s0 = inlined_call_operand.vmem [shape: f32[8,32], index: 0, kind: input, shape index: {}]
  %s1 = inlined_call_operand.vmem [shape: f32[8,1], index: 1, kind: input, shape index: {}]
  %s2 = inlined_call_operand.hbm [shape: f32[32,64], index: 2, kind: input, shape index: {}]
  %s3 = inlined_call_operand.vmem [shape: f32[1,64], index: 3, kind: input, shape index: {}]
  %s4 = inlined_call_operand.vmem [shape: f32[1,64], index: 4, kind: input, shape index: {}]
  %s5 = inlined_call_operand.vmem [shape: f32[1,64], index: 5, kind: input, shape index: {}]
  %s6 = inlined_call_operand.<no memory space> [shape: f32[1,1], index: 6, kind: input, shape index: {}]
  %s7 = inlined_call_operand.vmem [shape: f32[8,1], index: 7, kind: output, shape index: {}]
  %s8 = sld [smem:[#allocation0]]
  $region42: #{tpu_custom_call.1} parent=0
    _
  %s10 = ssub.s32 1, %s8
  %s11 = scalar_select 0, %s10, %s8
  %v12 = vstv %s6
  %13 = vst [vmem:[#allocation2] sm:$0x1] %v12
  $region1: #{tpu_custom_call.1} parent=0
    #allocation3 [shape = 'u8[16384]{0}', space=vmem, size = 0x4000, scoped, tag = 'input window, operand 2, single buffered']
    #allocation4 [shape = 's32[1]{0}', space=sflag, size = 0x4, scoped, tag = 'scoped memory for tpu_custom_call.1']
    %14 = vsyncpa [#allocation4], 0
    // Predicated region
    $region2: #{tpu_custom_call.1} parent=1 // pred_check
      _
    $region3: #{tpu_custom_call.1} parent=1 // pred_check_branch
      %16 = sbr.rel (0) target = $region5
    $region4: #{tpu_custom_call.1} parent=1 // pred_region
      _
    $region5: #{tpu_custom_call.1} parent=1 // pred_fallthru
      _
    // Predicated region
    $region6: #{tpu_custom_call.1} parent=1 // pred_check
      _
    $region7: #{tpu_custom_call.1} parent=1 // pred_check_branch
      %18 = sbr.rel (0) target = $region9
    $region8: #{tpu_custom_call.1} parent=1 // pred_region
      _
    $region9: #{tpu_custom_call.1} parent=1 // pred_fallthru
      _
    // Predicated region
    $region10: #{tpu_custom_call.1} parent=1 // pred_check
      _
    $region11: #{tpu_custom_call.1} parent=1 // pred_check_branch
      %20 = sbr.rel (0) target = $region13
    $region12: #{tpu_custom_call.1} parent=1 // pred_region
      %s22 = ssub.s32 512, 512
      %23 = vsyncadd [#allocation4], %s22
      %s24 = sshll.u32 [#allocation3], 4
      %s25 = int_to_ptr.vmem [resolvable:$true] %s24
      %30 = dma.hbm_to_vmem [thread:$0]  %s2, 512, %s25, [#allocation4], 128, 128, 8
    $region13: #{tpu_custom_call.1} parent=1 // pred_fallthru
      _
    // Predicated region
    $region14: #{tpu_custom_call.1} parent=1 // pred_check
      _
    $region15: #{tpu_custom_call.1} parent=1 // pred_check_branch
      %32 = sbr.rel (0) target = $region17
    $region16: #{tpu_custom_call.1} parent=1 // pred_region
      _
    $region17: #{tpu_custom_call.1} parent=1 // pred_fallthru
      _
    // Predicated region
    $region18: #{tpu_custom_call.1} parent=1 // pred_check
      _
    $region19: #{tpu_custom_call.1} parent=1 // pred_check_branch
      %34 = sbr.rel (0) target = $region21
    $region20: #{tpu_custom_call.1} parent=1 // pred_region
      _
    $region21: #{tpu_custom_call.1} parent=1 // pred_fallthru
      _
    // Predicated region
    $region22: #{tpu_custom_call.1} parent=1 // pred_check
      _
    $region23: #{tpu_custom_call.1} parent=1 // pred_check_branch
      %36 = sbr.rel (0) target = $region25
    $region24: #{tpu_custom_call.1} parent=1 // pred_region
      _
    $region25: #{tpu_custom_call.1} parent=1 // pred_fallthru
      _
    // Predicated region
    $region26: #{tpu_custom_call.1} parent=1 // pred_check
      _
    $region27: #{tpu_custom_call.1} parent=1 // pred_check_branch
      %38 = sbr.rel (0) target = $region29
    $region28: #{tpu_custom_call.1} parent=1 // pred_region
      _
    $region29: #{tpu_custom_call.1} parent=1 // pred_fallthru
      _
    // Predicated region
    $region30: #{tpu_custom_call.1} parent=1 // pred_check
      _
    $region31: #{tpu_custom_call.1} parent=1 // pred_check_branch
      %40 = sbr.rel (0) target = $region33
    $region32: #{tpu_custom_call.1} parent=1 // pred_region
      %41 = dma.done [#allocation4], 512
    $region33: #{tpu_custom_call.1} parent=1 // pred_fallthru
      _
    %v42 = vld [vmem:[%s0] sm:$0xff]
    %v43 = vld [vmem:[#allocation3] sm:$0xff]
    %v44 = vld [vmem:[#allocation3 + $0x8] sm:$0xff]
    %v45 = vld [vmem:[#allocation3 + $0x10] sm:$0xff]
    %v46 = vld [vmem:[#allocation3 + $0x18] sm:$0xff]
    %v47 = vld [vmem:[%s1] sm:$0xff]
    %v48 = vld [vmem:[%s3] sm:$0x1]
    %50 = vset.pattern.permute.xlu0 0
    %51 = vperm.xlu0 %50, %v47
    %v52 = vpop.permute.xlu0 %51
    %v55 = vlaneseq
    %v56 = vshrl.u32 %v55, 7
    %v57 = vsub.s32 0, %v56
    %v58 = vrot.slane %v48, %v57
    %v60 = vmul.f32 %v52, %v58
    %vm61 = vcmask 261120
    %v63 = vsel %vm61, %v42, 0
    %65 = vmatprep.subr.mxu0 0.0
    %66 = vmatpush1.msra.mxu0 0.0
    %67 = vmatprep.subr.mxu0 0.0
    %68 = vmatpush1.msra.mxu0 0.0
    %69 = vmatprep.subr.mxu0 0.0
    %70 = vmatpush1.msra.mxu0 0.0
    %71 = vmatprep.subr.mxu0 0.0
    %72 = vmatpush1.msra.mxu0 0.0
    %73 = vmatprep.subr.mxu0 0.0
    %74 = vmatpush1.msra.mxu0 0.0
    %75 = vmatprep.subr.mxu0 0.0
    %76 = vmatpush1.msra.mxu0 0.0
    %77 = vmatprep.subr.mxu0 0.0
    %78 = vmatpush1.msra.mxu0 0.0
    %79 = vmatprep.subr.mxu0 0.0
    %80 = vmatpush1.msra.mxu0 0.0
    %81 = vmatprep.subr.mxu0 0.0
    %82 = vmatpush1.msra.mxu0 0.0
    %83 = vmatprep.subr.mxu0 0.0
    %84 = vmatpush1.msra.mxu0 0.0
    %85 = vmatprep.subr.mxu0 0.0
    %86 = vmatpush1.msra.mxu0 0.0
    %87 = vmatprep.subr.mxu0 0.0
    %88 = vmatpush1.msra.mxu0 0.0
    %89 = vmatprep.subr.mxu0 0.0
    %90 = vmatpush1.msra.mxu0 %v46
    %91 = vmatprep.subr.mxu0 0.0
    %92 = vmatpush1.msra.mxu0 %v45
    %93 = vmatprep.subr.mxu0 0.0
    %94 = vmatpush1.msra.mxu0 %v44
    %95 = vmatprep.subr.mxu0 0.0
    %96 = vmatpush1.msra.mxu0 %v43
    %97 = vmatprep.subr.mxu0 0.0
    %98 = vmatpush2.msra.mxu0 0.0
    %99 = vmatprep.subr.mxu0 0.0
    %100 = vmatpush2.msra.mxu0 0.0
    %101 = vmatprep.subr.mxu0 0.0
    %102 = vmatpush2.msra.mxu0 0.0
    %103 = vmatprep.subr.mxu0 0.0
    %104 = vmatpush2.msra.mxu0 0.0
    %105 = vmatprep.subr.mxu0 0.0
    %106 = vmatpush2.msra.mxu0 0.0
    %107 = vmatprep.subr.mxu0 0.0
    %108 = vmatpush2.msra.mxu0 0.0
    %109 = vmatprep.subr.mxu0 0.0
    %110 = vmatpush2.msra.mxu0 0.0
    %111 = vmatprep.subr.mxu0 0.0
    %112 = vmatpush2.msra.mxu0 0.0
    %113 = vmatprep.subr.mxu0 0.0
    %114 = vmatpush2.msra.mxu0 0.0
    %115 = vmatprep.subr.mxu0 0.0
    %116 = vmatpush2.msra.mxu0 0.0
    %117 = vmatprep.subr.mxu0 0.0
    %118 = vmatpush2.msra.mxu0 0.0
    %119 = vmatprep.subr.mxu0 0.0
    %120 = vmatpush2.msra.mxu0 0.0
    %121 = vmatprep.subr.mxu0 0.0
    %122 = vmatpush2.msra.mxu0 0.0
    %123 = vmatprep.subr.mxu0 0.0
    %124 = vmatpush2.msra.mxu0 0.0
    %125 = vmatprep.subr.mxu0 0.0
    %126 = vmatpush2.msra.mxu0 0.0
    %127 = vmatprep.subr.mxu0 0.0
    %128 = vmatpush2.msra.mxu0 0.0
    %129 = vmatprep.mubr.f32.mxu0 0.0
    %130 = vmatmul.mubr.f32.gmra.mxu0 %v63
    %v131 = vpop.f32.mrf.mxu0
    %v132 = vadd.f32 %v60, %v131
    %v133 = vpop.f32.mrf.mxu0
    %134 = vdwg.mxu0
    %v135 = vld [vmem:[%s4] sm:$0x1]
    %v137 = vlaneseq
    %v138 = vshrl.u32 %v137, 7
    %v139 = vsub.s32 0, %v138
    %v140 = vrot.slane %v135, %v139
    %v142 = vadd.f32 %v132, %v140
    %v143 = vmax.f32 %v142, 0.0
    %v144 = vld [vmem:[%s5] sm:$0x1]
    %v146 = vlaneseq
    %v147 = vshrl.u32 %v146, 7
    %v148 = vsub.s32 0, %v147
    %v149 = vrot.slane %v144, %v148
    %v151 = vmul.f32 %v143, %v149
    %vm152 = vcmask 523264
    %v153 = vsel %vm152, %v151, 0.0
    %154 = vadd.xlane.f32.xlu0 %v153
    %v155 = vpop.xlane.xlu0 %154
    %v156 = vld [vmem:[#allocation2] sm:$0x1]
    %v158 = vlaneseq
    %v159 = vshrl.u32 %v158, 7
    %v160 = vsub.s32 0, %v159
    %v161 = vrot.slane %v156, %v160
    %v163 = vadd.f32 %v155, %v161
    %vm164 = vcmask 7168
    %165 = vst.msk [vmem:[%s7] sm:$0xff] %vm164, %v163
    // Predicated region
    $region34: #{tpu_custom_call.1} parent=1 // pred_check
      _
    $region35: #{tpu_custom_call.1} parent=1 // pred_check_branch
      %167 = sbr.rel (0) target = $region37
    $region36: #{tpu_custom_call.1} parent=1 // pred_region
      _
    $region37: #{tpu_custom_call.1} parent=1 // pred_fallthru
      _
    // Predicated region
    $region38: #{tpu_custom_call.1} parent=1 // pred_check
      _
    $region39: #{tpu_custom_call.1} parent=1 // pred_check_branch
      %169 = sbr.rel (0) target = $region41
    $region40: #{tpu_custom_call.1} parent=1 // pred_region
      _
    $region41: #{tpu_custom_call.1} parent=1 // pred_fallthru
      _
    %170 = vsyncpa [#allocation4], 1

</llo_original>
